<compile_context>
chip_gen: v5e
topology: v5e:2x2
jax: 0.10.0
libtpu: 0.0.40
codegen_flags: <defaults>
</compile_context>

<pallas_src>
import functools

import jax
import jax.numpy as jnp
import numpy as np
from jax.experimental import pallas as pl
from jax.experimental.pallas import tpu as pltpu

EPS = float(np.finfo(np.float32).eps)


def planar_flow_kernel(x_ref, v_ref, w_ref, b_ref, fz_ref, logdet_ref, *,
                       normalize_u: bool):
    x = x_ref[...]                     # (T, D) f32 tile
    v = v_ref[...]                     # (1, D) f32
    w = w_ref[...]                     # (1, D) f32
    b = b_ref[0, 0]                    # f32 scalar (SMEM)

    # --- u-normalization (v_hat): (1, D)-scale work, recomputed per grid step;
    #     cheap enough to hide under the tile DMA and safe under "parallel".
    if normalize_u:
        wtu = jnp.sum(w * v)                                          # w @ v.T (scalar)
        # stable softplus: log1p(exp(wtu)) == max(wtu,0) + log1p(exp(-|wtu|))
        softplus = jnp.maximum(wtu, 0.0) + jnp.log1p(jnp.exp(-jnp.abs(wtu)))
        m_wtu = softplus - 1.0
        wtw = jnp.sum(w * w) + EPS                                    # w @ w.T + eps
        v_hat = v + ((m_wtu - wtu) / wtw) * w                         # (1, D)
    else:
        v_hat = v

    wtv_hat = jnp.sum(w * v_hat)       # scalar: w @ v_hat.T (for the det shortcut)

    # --- hot path over the (T, D) tile -------------------------------------
    wtz_b = jnp.sum(x * w, axis=-1, keepdims=True) + b                # (T, 1) == z @ w.T + b
    t = jnp.tanh(wtz_b)                                               # (T, 1)
    fz_ref[...] = x + v_hat * t                                       # (T, D)

    # psi @ v_hat.T == (1 - t^2) * (w . v_hat)  -> no (T, D) psi temporary.
    det = 1.0 + (1.0 - t * t) * wtv_hat                               # (T, 1)
    logdet_ref[...] = jnp.log(jnp.abs(det) + EPS)                     # (T, 1)


def _choose_tile_n(n, d, itemsize=4,
                   vmem_tile_budget_bytes=16 * 1024 * 1024, max_tile=16384):
    """Rows per tile: keep 2x double-buffered (TILE_N, D) x/fz tiles <= budget."""
    per_row_bytes = 4 * d * itemsize          # (x + fz) * double-buffer
    tile = vmem_tile_budget_bytes // max(per_row_bytes, 1)
    tile = max(8, min(tile, max_tile))
    tile = (tile // 8) * 8                    # sublane multiple
    if n <= tile:
        return n                              # single block == full batch (always legal)
    return tile


def planar_flow(x, v, w, b, normalize_u=True, tile_n=None):
    """x: (N, D) f32; v, w: (1, D) f32; b: (1,) f32. Returns (f_z, log|det J|)."""
    N, D = x.shape
    x = x.astype(jnp.float32)
    v = v.astype(jnp.float32)
    w = w.astype(jnp.float32)
    b2 = b.reshape(1, 1).astype(jnp.float32)

    if tile_n is None:
        tile_n = _choose_tile_n(N, D)
    grid = (pl.cdiv(N, tile_n),)

    fz, logdet = pl.pallas_call(
        functools.partial(planar_flow_kernel, normalize_u=normalize_u),
        grid=grid,
        in_specs=[
            pl.BlockSpec((tile_n, D), lambda i: (i, 0)),              # x tile
            pl.BlockSpec((1, D), lambda i: (0, 0)),                   # v (resident)
            pl.BlockSpec((1, D), lambda i: (0, 0)),                   # w (resident)
            pl.BlockSpec(memory_space=pltpu.MemorySpace.SMEM),        # b scalar
        ],
        out_specs=(
            pl.BlockSpec((tile_n, D), lambda i: (i, 0)),              # f_z tile
            pl.BlockSpec((tile_n, 1), lambda i: (i, 0)),              # log|det| tile
        ),
        out_shape=(
            jax.ShapeDtypeStruct((N, D), x.dtype),
            jax.ShapeDtypeStruct((N, 1), jnp.float32),
        ),
        compiler_params=pltpu.CompilerParams(
            dimension_semantics=("parallel",),        # v7x: shard batch over both TCs
            vmem_limit_bytes=32 * 1024 * 1024,        # raise v5e's 16 MiB default
        ),
    )(x, v, w, b2)

    # matches torch .squeeze() for N > 1 (for N == 1 torch returns a 0-d scalar)
    return fz, logdet.reshape(-1)


def planar_flow_ref(x, v, w, b, normalize_u=True):
    """Pure-JAX reference mirroring the PyTorch module."""
    v_hat = v
    if normalize_u:
        wtu = jnp.squeeze(w @ v.T)
        m_wtu = -1.0 + jnp.log1p(jnp.exp(wtu))
        v_hat = v + (m_wtu - wtu) * w / (jnp.squeeze(w @ w.T) + EPS)
    wtz_plus_b = x @ w.T + b
    t = jnp.tanh(wtz_plus_b)
    f_z = x + v_hat * t
    psi = (1.0 - t ** 2) * w
    det = 1.0 + psi @ v_hat.T
    return f_z, jnp.squeeze(jnp.log(jnp.abs(det) + EPS))


if __name__ == "__main__":
    init_sigma = 0.01
    root = jax.random.PRNGKey(0)

    def make_inputs(batch, vec_len):
        kx, kv, kw = jax.random.split(jax.random.fold_in(root, batch * 1000 + vec_len), 3)
        x = jax.random.normal(kx, (batch, vec_len), dtype=jnp.float32)
        # Deterministic parameter init matching __init__: N(0, init_sigma), b = 0.
        v = init_sigma * jax.random.normal(kv, (1, vec_len), dtype=jnp.float32)
        w = init_sigma * jax.random.normal(kw, (1, vec_len), dtype=jnp.float32)
        b = jnp.zeros((1,), dtype=jnp.float32)
        return x, v, w, b

    # 1) Module-sized demo: batch=8, vec_len=32 (single-block grid).
    x, v, w, b = make_inputs(8, 32)
    fz, logdet = planar_flow(x, v, w, b, normalize_u=True)
    jax.block_until_ready((fz, logdet))
    fz_r, ld_r = planar_flow_ref(x, v, w, b, normalize_u=True)
    np.testing.assert_allclose(np.asarray(fz), np.asarray(fz_r), rtol=1e-5, atol=1e-6)
    np.testing.assert_allclose(np.asarray(logdet), np.asarray(ld_r), rtol=1e-5, atol=1e-6)

    # 2) Multi-tile grid path with a partial last block (forced small tile).
    x, v, w, b = make_inputs(44, 32)
    fz, logdet = planar_flow(x, v, w, b, normalize_u=True, tile_n=16)
    jax.block_until_ready((fz, logdet))
    fz_r, ld_r = planar_flow_ref(x, v, w, b, normalize_u=True)
    np.testing.assert_allclose(np.asarray(fz), np.asarray(fz_r), rtol=1e-5, atol=1e-6)
    np.testing.assert_allclose(np.asarray(logdet), np.asarray(ld_r), rtol=1e-5, atol=1e-6)

    print("KERNEL_OK")
</pallas_src>

<mosaic_0001>
module attributes {stable_mosaic.version = 11 : i64} {
  func.func @planar_flow_kernel(%arg0: i32, %arg1: memref<8x32xf32, #tpu.memory_space<vmem>>, %arg2: memref<1x32xf32, #tpu.memory_space<vmem>>, %arg3: memref<1x32xf32, #tpu.memory_space<vmem>>, %arg4: memref<1x1xf32, #tpu.memory_space<smem>>, %arg5: memref<8x32xf32, #tpu.memory_space<vmem>>, %arg6: memref<8x1xf32, #tpu.memory_space<vmem>>) attributes {dimension_semantics = [#tpu.dimension_semantics<parallel>], iteration_bounds = array<i64: 1>, scalar_prefetch = 0 : i64, scratch_operands = 0 : i64, tpu.core_type = #tpu.core_type<tc>, window_params = [{transform_indices = @transform_0, window_bounds = array<i64: 8, 32>}, {pipeline_mode = #tpu.pipeline_mode<synchronous>, transform_indices = @transform_1, window_bounds = array<i64: 1, 32>}, {pipeline_mode = #tpu.pipeline_mode<synchronous>, transform_indices = @transform_2, window_bounds = array<i64: 1, 32>}, {transform_indices = @transform_3, window_bounds = array<i64: 1, 1>}, {transform_indices = @transform_4, window_bounds = array<i64: 8, 32>}, {transform_indices = @transform_5, window_bounds = array<i64: 8, 1>}]} {
    %c0 = arith.constant 0 : index
    %c0_0 = arith.constant 0 : index
    %0 = vector.load %arg1[%c0, %c0_0] : memref<8x32xf32, #tpu.memory_space<vmem>>, vector<8x32xf32>
    %c0_1 = arith.constant 0 : index
    %c0_2 = arith.constant 0 : index
    %1 = vector.load %arg2[%c0_1, %c0_2] : memref<1x32xf32, #tpu.memory_space<vmem>>, vector<1x32xf32>
    %c0_3 = arith.constant 0 : index
    %c0_4 = arith.constant 0 : index
    %2 = vector.load %arg3[%c0_3, %c0_4] : memref<1x32xf32, #tpu.memory_space<vmem>>, vector<1x32xf32>
    %c0_5 = arith.constant 0 : index
    %c0_6 = arith.constant 0 : index
    %3 = memref.load %arg4[%c0_5, %c0_6] : memref<1x1xf32, #tpu.memory_space<smem>>
    %4 = arith.mulf %2, %1 : vector<1x32xf32>
    %5 = vector.shape_cast %4 : vector<1x32xf32> to vector<1x1x32xf32>
    %cst = arith.constant dense<0.000000e+00> : vector<1xf32>
    %6 = vector.multi_reduction <add>, %5, %cst [1, 2] : vector<1x1x32xf32> to vector<1xf32>
    %7 = vector.shape_cast %6 : vector<1xf32> to vector<1x1x1xf32>
    %8 = vector.extract %7[0, 0, 0] : f32 from vector<1x1x1xf32>
    %cst_7 = arith.constant 0.000000e+00 : f32
    %9 = arith.maximumf %8, %cst_7 : f32
    %10 = math.absf %8 : f32
    %cst_8 = arith.constant 0.000000e+00 : f32
    %11 = arith.subf %cst_8, %10 : f32
    %12 = math.exp %11 : f32
    %13 = math.log1p %12 : f32
    %14 = arith.addf %9, %13 : f32
    %cst_9 = arith.constant 1.000000e+00 : f32
    %15 = arith.subf %14, %cst_9 : f32
    %16 = arith.mulf %2, %2 : vector<1x32xf32>
    %17 = vector.shape_cast %16 : vector<1x32xf32> to vector<1x1x32xf32>
    %cst_10 = arith.constant dense<0.000000e+00> : vector<1xf32>
    %18 = vector.multi_reduction <add>, %17, %cst_10 [1, 2] : vector<1x1x32xf32> to vector<1xf32>
    %19 = vector.shape_cast %18 : vector<1xf32> to vector<1x1x1xf32>
    %20 = vector.extract %19[0, 0, 0] : f32 from vector<1x1x1xf32>
    %cst_11 = arith.constant 1.1920929E-7 : f32
    %21 = arith.addf %20, %cst_11 : f32
    %22 = arith.subf %15, %8 : f32
    %23 = arith.divf %22, %21 : f32
    %24 = vector.broadcast %23 : f32 to vector<1x32xf32>
    %25 = arith.mulf %24, %2 : vector<1x32xf32>
    %26 = arith.addf %1, %25 : vector<1x32xf32>
    %27 = arith.mulf %2, %26 : vector<1x32xf32>
    %28 = vector.shape_cast %27 : vector<1x32xf32> to vector<1x1x32xf32>
    %cst_12 = arith.constant dense<0.000000e+00> : vector<1xf32>
    %29 = vector.multi_reduction <add>, %28, %cst_12 [1, 2] : vector<1x1x32xf32> to vector<1xf32>
    %30 = vector.shape_cast %29 : vector<1xf32> to vector<1x1x1xf32>
    %31 = vector.extract %30[0, 0, 0] : f32 from vector<1x1x1xf32>
    %32 = vector.broadcast %2 : vector<1x32xf32> to vector<8x32xf32>
    %33 = arith.mulf %0, %32 : vector<8x32xf32>
    %cst_13 = arith.constant dense<0.000000e+00> : vector<8xf32>
    %34 = vector.multi_reduction <add>, %33, %cst_13 [1] : vector<8x32xf32> to vector<8xf32>
    %35 = vector.shape_cast %34 : vector<8xf32> to vector<8x1xf32>
    %36 = vector.broadcast %3 : f32 to vector<8x1xf32>
    %37 = arith.addf %35, %36 : vector<8x1xf32>
    %38 = math.tanh %37 : vector<8x1xf32>
    %39 = vector.broadcast %26 : vector<1x32xf32> to vector<8x32xf32>
    %40 = vector.broadcast %38 : vector<8x1xf32> to vector<8x32xf32>
    %41 = arith.mulf %39, %40 : vector<8x32xf32>
    %42 = arith.addf %0, %41 : vector<8x32xf32>
    %c0_14 = arith.constant 0 : index
    %c0_15 = arith.constant 0 : index
    %43 = vector.load %arg5[%c0_14, %c0_15] : memref<8x32xf32, #tpu.memory_space<vmem>>, vector<8x32xf32>
    tpu.vector_store %arg5[%c0_14, %c0_15], %42 {strides = array<i32>} : memref<8x32xf32, #tpu.memory_space<vmem>>, vector<8x32xf32>,
    %44 = arith.mulf %38, %38 : vector<8x1xf32>
    %cst_16 = arith.constant 1.000000e+00 : f32
    %45 = vector.broadcast %cst_16 : f32 to vector<8x1xf32>
    %46 = arith.subf %45, %44 : vector<8x1xf32>
    %47 = vector.broadcast %31 : f32 to vector<8x1xf32>
    %48 = arith.mulf %46, %47 : vector<8x1xf32>
    %cst_17 = arith.constant 1.000000e+00 : f32
    %49 = vector.broadcast %cst_17 : f32 to vector<8x1xf32>
    %50 = arith.addf %49, %48 : vector<8x1xf32>
    %51 = math.absf %50 : vector<8x1xf32>
    %cst_18 = arith.constant 1.1920929E-7 : f32
    %52 = vector.broadcast %cst_18 : f32 to vector<8x1xf32>
    %53 = arith.addf %51, %52 : vector<8x1xf32>
    %54 = math.log %53 : vector<8x1xf32>
    %c0_19 = arith.constant 0 : index
    %c0_20 = arith.constant 0 : index
    %55 = vector.load %arg6[%c0_19, %c0_20] : memref<8x1xf32, #tpu.memory_space<vmem>>, vector<8x1xf32>
    tpu.vector_store %arg6[%c0_19, %c0_20], %54 {strides = array<i32>} : memref<8x1xf32, #tpu.memory_space<vmem>>, vector<8x1xf32>,
    return
  }
  func.func @transform_0(%arg0: i32) -> (i32, i32) {
    %c0_i32 = arith.constant 0 : i32
    %c0_i32_0 = arith.constant 0 : i32
    return %arg0, %c0_i32 : i32, i32
  }
  func.func @transform_1(%arg0: i32) -> (i32, i32) {
    %c0_i32 = arith.constant 0 : i32
    %c0_i32_0 = arith.constant 0 : i32
    %c0_i32_1 = arith.constant 0 : i32
    return %c0_i32, %c0_i32_0 : i32, i32
  }
  func.func @transform_2(%arg0: i32) -> (i32, i32) {
    %c0_i32 = arith.constant 0 : i32
    %c0_i32_0 = arith.constant 0 : i32
    %c0_i32_1 = arith.constant 0 : i32
    return %c0_i32, %c0_i32_0 : i32, i32
  }
  func.func @transform_3(%arg0: i32) -> (i32, i32) {
    %c0_i32 = arith.constant 0 : i32
    %c0_i32_0 = arith.constant 0 : i32
    %c0_i32_1 = arith.constant 0 : i32
    return %c0_i32, %c0_i32_0 : i32, i32
  }
  func.func @transform_4(%arg0: i32) -> (i32, i32) {
    %c0_i32 = arith.constant 0 : i32
    %c0_i32_0 = arith.constant 0 : i32
    return %arg0, %c0_i32 : i32, i32
  }
  func.func @transform_5(%arg0: i32) -> (i32, i32) {
    %c0_i32 = arith.constant 0 : i32
    %c0_i32_0 = arith.constant 0 : i32
    return %arg0, %c0_i32 : i32, i32
  }
}

</mosaic_0001>

<llo_original>
// kernel: tpu_custom_call.1
$region0: #{tpu_custom_call.1}
  #allocation0 [shape = 'u32[]', space=smem, size = 0x4, offset = 0x4, fixed_abs, tag = 'smem constant byte address 0x4 - core index']
  #allocation1 [shape = 'u32[72,128]{1,0:T(1,128)}', space=vmem, size = 0x9000, scoped, tag = 'internal scratch']
  #allocation2 [shape = 'f32[1,1]{1,0:T(1,128)S(6)}', space=smem, size = 0x200, scoped, tag = 'scoped memory for tpu_custom_call.1']
  %s0 = inlined_call_operand.hbm [shape: f32[8,32], index: 0, kind: input, shape index: {}]
  %s1 = inlined_call_operand.vmem [shape: f32[1,32], index: 1, kind: input, shape index: {}]
  %s2 = inlined_call_operand.vmem [shape: f32[1,32], index: 2, kind: input, shape index: {}]
  %s3 = inlined_call_operand.<no memory space> [shape: f32[1,1], index: 3, kind: input, shape index: {}]
  %s4 = inlined_call_operand.hbm [shape: f32[8,32], index: 4, kind: output, shape index: {0}]
  %s5 = inlined_call_operand.vmem [shape: f32[8,1], index: 5, kind: output, shape index: {1}]
  %6 = xla_tuple %s4, %s5
  %s7 = sld [smem:[#allocation0]]
  $region38: #{tpu_custom_call.1} parent=0
    _
  %s9 = ssub.s32 1, %s7
  %s10 = scalar_select 0, %s9, %s7
  %11 = sst [smem:[#allocation2]] %s3
  $region1: #{tpu_custom_call.1} parent=0
    #allocation3 [shape = 'u8[4096]{0}', space=vmem, size = 0x1000, scoped, tag = 'input window, operand 0, single buffered']
    #allocation4 [shape = 's32[1]{0}', space=sflag, size = 0x4, scoped, tag = 'scoped memory for tpu_custom_call.1']
    #allocation5 [shape = 's32[1]{0}', space=sflag, size = 0x4, scoped, tag = 'scoped memory for tpu_custom_call.1']
    #allocation6 [shape = 'u8[4096]{0}', space=vmem, size = 0x1000, scoped, tag = 'output window, operand 0, single buffered']
    %12 = vsyncpa [#allocation4], 0
    %13 = vsyncpa [#allocation5], 0
    // Predicated region
    $region2: #{tpu_custom_call.1} parent=1 // pred_check
      _
    $region3: #{tpu_custom_call.1} parent=1 // pred_check_branch
      %15 = sbr.rel (0) target = $region5
    $region4: #{tpu_custom_call.1} parent=1 // pred_region
      %17 = vsyncadd [#allocation4], 0
      %s19 = sshll.u32 %s0, 4
      %s20 = int_to_ptr.hbm [resolvable:$true] %s19
      %s21 = sshll.u32 [#allocation3], 4
      %s22 = int_to_ptr.vmem [resolvable:$true] %s21
      %24 = dma.hbm_to_vmem [thread:$0]  %s20, 128, %s22, [#allocation4]
    $region5: #{tpu_custom_call.1} parent=1 // pred_fallthru
      _
    // Predicated region
    $region6: #{tpu_custom_call.1} parent=1 // pred_check
      _
    $region7: #{tpu_custom_call.1} parent=1 // pred_check_branch
      %26 = sbr.rel (0) target = $region9
    $region8: #{tpu_custom_call.1} parent=1 // pred_region
      _
    $region9: #{tpu_custom_call.1} parent=1 // pred_fallthru
      _
    // Predicated region
    $region10: #{tpu_custom_call.1} parent=1 // pred_check
      _
    $region11: #{tpu_custom_call.1} parent=1 // pred_check_branch
      %28 = sbr.rel (0) target = $region13
    $region12: #{tpu_custom_call.1} parent=1 // pred_region
      _
    $region13: #{tpu_custom_call.1} parent=1 // pred_fallthru
      _
    // Predicated region
    $region14: #{tpu_custom_call.1} parent=1 // pred_check
      _
    $region15: #{tpu_custom_call.1} parent=1 // pred_check_branch
      %30 = sbr.rel (0) target = $region17
    $region16: #{tpu_custom_call.1} parent=1 // pred_region
      _
    $region17: #{tpu_custom_call.1} parent=1 // pred_fallthru
      _
    // Predicated region
    $region18: #{tpu_custom_call.1} parent=1 // pred_check
      _
    $region19: #{tpu_custom_call.1} parent=1 // pred_check_branch
      %32 = sbr.rel (0) target = $region21
    $region20: #{tpu_custom_call.1} parent=1 // pred_region
      %34 = dma.done [#allocation4], 128
    $region21: #{tpu_custom_call.1} parent=1 // pred_fallthru
      _
    %v35 = vld [vmem:[#allocation3] sm:$0xff]
    %v36 = vld [vmem:[%s1] sm:$0x1]
    %v37 = vld [vmem:[%s2] sm:$0x1]
    %s38 = sld [smem:[#allocation2]]
    %v39 = vmul.f32 %v37, %v36
    %vm40 = vcmask 253952
    %v41 = vsel %vm40, %v39, 0.0
    %42 = vadd.xlane.f32.xlu0 %v41
    %v43 = vpop.xlane.xlu0 %42
    %v44 = vrot.slane %v43, 4
    %v45 = vadd.f32 %v43, %v44
    %v46 = vrot.slane %v45, 2
    %v47 = vadd.f32 %v45, %v46
    %v48 = vrot.slane %v47, 1
    %v49 = vadd.f32 %v47, %v48
    %s50 = vtos %v49
    %s51 = smax.f32 %s50, 0.0
    %s52 = sand.u32 2147483647, %s50
    %s53 = ssub.f32 0.0, %s52
    %v54 = vstv %s53
    %v55 = vmul.f32 %v54, 1.442695
    %v56 = vpow.pop %v55
    %s57 = vtos %v56
    %v58 = vstv %s57
    %v59 = vadd.f32 %v58, 1.0
    %v60 = vlog2.pop %v59
    %v61 = vmul.f32 %v60, 0.6931472
    %v62 = vmul.f32 -0.5, %v58
    %v63 = vadd.f32 %v62, 1.0
    %v64 = vmul.f32 %v63, %v58
    %v65 = vand.u32 2147483647, %v58
    %vm66 = vcmp.lt.f32.partialorder %v65, 0.0004427343
    %v67 = vsel %vm66, %v64, %v61
    %s68 = vtos %v67
    %s69 = sadd.f32 %s51, %s68
    %s70 = ssub.f32 %s69, 1.0
    %v71 = vmul.f32 %v37, %v37
    %v72 = vsel %vm40, %v71, 0.0
    %73 = vadd.xlane.f32.xlu0 %v72
    %v74 = vpop.xlane.xlu0 %73
    %v75 = vrot.slane %v74, 4
    %v76 = vadd.f32 %v74, %v75
    %v77 = vrot.slane %v76, 2
    %v78 = vadd.f32 %v76, %v77
    %v79 = vrot.slane %v78, 1
    %v80 = vadd.f32 %v78, %v79
    %s81 = vtos %v80
    %s82 = sadd.f32 %s81, 1.1920929e-07
    %s83 = ssub.f32 %s70, %s50
    %v84 = vstv %s82
    %v85 = vrcp.pop %v84
    %v86 = vmul.f32 %v84, %v85
    %v87 = vsub.f32 1.0, %v86
    %v88 = vmul.f32 %v85, %v87
    %v89 = vadd.f32 %v85, %v88
    %vm90 = vweird.f32 %v84
    %vm91 = vweird.f32 %v85
    %vm92 = vmor %vm90, %vm91
    %v93 = vsel %vm92, %v85, %v89
    %v94 = vand.u32 2147483647, %v84
    %vm95 = vcmp.eq.f32.partialorder %v94, 8.507059e+37
    %v96 = vand.u32 %v84, 2147483648
    %v97 = vor.u32 1.1754944e-38, %v96
    %v98 = vsel %vm95, %v97, %v93
    %s99 = vtos %v98
    %s100 = smul.f32 %s83, %s99
    %v101 = vstv %s100
    %v102 = vmul.f32 %v101, %v37
    %v103 = vadd.f32 %v36, %v102
    %v104 = vmul.f32 %v37, %v103
    %v105 = vsel %vm40, %v104, 0.0
    %106 = vadd.xlane.f32.xlu0 %v105
    %v107 = vpop.xlane.xlu0 %106
    %v108 = vrot.slane %v107, 4
    %v109 = vadd.f32 %v107, %v108
    %v110 = vrot.slane %v109, 2
    %v111 = vadd.f32 %v109, %v110
    %v112 = vrot.slane %v111, 1
    %v113 = vadd.f32 %v111, %v112
    %s114 = vtos %v113
    %v116 = vperm.slane %v37, 0
    %v118 = vmul.f32 %v35, %v116
    %vm119 = vcmask 261120
    %v120 = vsel %vm119, %v118, 0.0
    %121 = vadd.xlane.f32.xlu0 %v120
    %v122 = vpop.xlane.xlu0 %121
    %v123 = vstv %s38
    %v124 = vadd.f32 %v122, %v123
    %v125 = vtanh.pop %v124
    %v127 = vperm.slane %v103, 0
    %v129 = vmul.f32 %v127, %v125
    %v130 = vadd.f32 %v35, %v129
    %131 = vst.msk [vmem:[#allocation6] sm:$0xff] %vm119, %v130
    %v132 = vmul.f32 %v125, %v125
    %v133 = vsub.f32 1.0, %v132
    %v134 = vstv %s114
    %v135 = vmul.f32 %v133, %v134
    %v136 = vadd.f32 %v135, 1.0
    %v137 = vand.u32 2147483647, %v136
    %v138 = vadd.f32 %v137, 1.1920929e-07
    %v139 = vlog2.pop %v138
    %v140 = vmul.f32 %v139, 0.6931472
    %vm141 = vcmask 7168
    %142 = vst.msk [vmem:[%s5] sm:$0xff] %vm141, %v140
    // Predicated region
    $region22: #{tpu_custom_call.1} parent=1 // pred_check
      _
    $region23: #{tpu_custom_call.1} parent=1 // pred_check_branch
      %144 = sbr.rel (0) target = $region25
    $region24: #{tpu_custom_call.1} parent=1 // pred_region
      %146 = vsyncadd [#allocation5], 0
      %s148 = sshll.u32 [#allocation6], 4
      %s149 = int_to_ptr.vmem [resolvable:$true] %s148
      %s150 = sshll.u32 %s4, 4
      %s151 = int_to_ptr.hbm [resolvable:$true] %s150
      %153 = dma.vmem_to_hbm [thread:$0]  %s149, 128, %s151, [#allocation5]
    $region25: #{tpu_custom_call.1} parent=1 // pred_fallthru
      _
    // Predicated region
    $region26: #{tpu_custom_call.1} parent=1 // pred_check
      _
    $region27: #{tpu_custom_call.1} parent=1 // pred_check_branch
      %155 = sbr.rel (0) target = $region29
    $region28: #{tpu_custom_call.1} parent=1 // pred_region
      _
    $region29: #{tpu_custom_call.1} parent=1 // pred_fallthru
      _
    // Predicated region
    $region30: #{tpu_custom_call.1} parent=1 // pred_check
      _
    $region31: #{tpu_custom_call.1} parent=1 // pred_check_branch
      %157 = sbr.rel (0) target = $region33
    $region32: #{tpu_custom_call.1} parent=1 // pred_region
      %159 = dma.done [#allocation5], 128
    $region33: #{tpu_custom_call.1} parent=1 // pred_fallthru
      _
    // Predicated region
    $region34: #{tpu_custom_call.1} parent=1 // pred_check
      _
    $region35: #{tpu_custom_call.1} parent=1 // pred_check_branch
      %161 = sbr.rel (0) target = $region37
    $region36: #{tpu_custom_call.1} parent=1 // pred_region
      _
    $region37: #{tpu_custom_call.1} parent=1 // pred_fallthru
      _
    %162 = vsyncpa [#allocation4], 1
    %163 = vsyncpa [#allocation5], 1

</llo_original>
